<compile_context>
chip_gen: v7x
topology: tpu7x:2x2x1
jax: 0.10.0
libtpu: 0.0.40
codegen_flags: <defaults>
</compile_context>

<pallas_src>
import functools
import math

import jax
import jax.numpy as jnp
from jax.experimental import pallas as pl
from jax.experimental.pallas import tpu as pltpu

EPS = 1e-5
_LANE = 128
_SUBLANE = 8
_MAX_BLOCK_BYTES = 4 * 1024 * 1024        # streaming tiles (apply / stats)
_MAX_FUSED_BLOCK_BYTES = 8 * 1024 * 1024  # resident reduction block (fused norm)
_VMEM_LIMIT_BYTES = 48 * 1024 * 1024      # < v7x 64 MiB physical, >> v5e 16 MiB default


# ----------------------------- tiling helpers ---------------------------------
def _sublane(dtype):
    # packed sublane granule: 8 rows for 4-byte, 16 for bf16, 32 for int8/fp8
    return max(_SUBLANE, 32 // jnp.dtype(dtype).itemsize)


def _fold_factor(T, C):
    """k so that the free contiguous view (T, C) -> (T/k, k*C) is lane-dense
    ((k*C) % 128 == 0).  Returns 1 when no free fold exists."""
    if C >= _LANE or C <= 0 or T <= 1:
        return 1
    k = _LANE // math.gcd(C, _LANE)       # minimal k; always a power of two
    if k <= 1 or T % k != 0:
        # TODO(synk): for C << 128 with T not divisible by k, a (B, C, T)
        # transpose would restore lane density at the cost of an extra HBM pass.
        return 1
    return k


def _pick_c_tile(rows, C, itemsize, max_block_bytes=_MAX_BLOCK_BYTES):
    """Channel (lane) tile: lane-dense multiple of 128, rows*tc*itemsize <= budget."""
    if C <= _LANE:
        return C                                    # full C (only legal choice)
    max_lanes = max(_LANE, max_block_bytes // max(1, rows * itemsize))
    max_lanes = (max_lanes // _LANE) * _LANE
    if C % _LANE == 0:
        # largest 128-multiple divisor of C under the budget (no masked tail)
        for cand in range(min(max_lanes, C), _LANE - 1, -_LANE):
            if C % cand == 0:
                return cand
        return _LANE
    # C > 128, not a multiple of 128: fixed lane-dense tile; pl.cdiv(C, tc)
    # yields one masked tail block instead of a whole-C non-aligned block.
    return min(max_lanes, max(_LANE, (C // _LANE) * _LANE))


def _pick_t_tile(R, width, itemsize, *, sublane, max_block_bytes=_MAX_BLOCK_BYTES):
    """Row tile: divisor of R that is a multiple of the sublane granule."""
    max_rows = max(sublane, max_block_bytes // max(1, width * itemsize))
    if R <= max_rows:
        return R
    start = (min(max_rows, R) // sublane) * sublane
    for cand in range(start, sublane - 1, -sublane):
        if R % cand == 0:
            return cand
    return R


def _compiler_params(sem):
    return pltpu.CompilerParams(dimension_semantics=sem,
                                vmem_limit_bytes=_VMEM_LIMIT_BYTES)


# --------------------------------- kernels -------------------------------------
def _fold_lane_reduce(v, k):
    """v: (1, 1, k*C).  Sum the k interleaved channel groups so EVERY lane ends
    up holding its channel's total (log2(k) XLU roll-adds; k is a power of 2)."""
    if k <= 1:
        return v
    L = v.shape[-1]
    shift = L // k
    while shift < L:
        v = v + pltpu.roll(v, shift=shift, axis=2)
        shift *= 2
    return v


def _revin_norm_fused_kernel(x_ref, gamma_ref, beta_ref, y_ref, stats_ref, *,
                             affine, fold_k, n_time, out_c):
    """Fused stats + normalize on a VMEM-resident (1, R, L) tile.
    fold_k > 1 means the lane axis holds fold_k interleaved time groups."""
    xf = x_ref[...].astype(jnp.float32)                       # (1, R, L)

    # pass 1: mean (two-pass variance -> no catastrophic cancellation)
    s = jnp.sum(xf, axis=1, keepdims=True)                    # (1, 1, L)
    s = _fold_lane_reduce(s, fold_k)
    mean = s * jnp.float32(1.0 / n_time)

    # pass 2: centred sum of squares -> unbiased std (torch default, ddof=1)
    d = xf - mean
    sq = jnp.sum(d * d, axis=1, keepdims=True)
    sq = _fold_lane_reduce(sq, fold_k)
    ddof = jnp.float32(1.0 / (n_time - 1)) if n_time > 1 else jnp.float32(jnp.nan)
    std = jnp.sqrt(jnp.maximum(sq, 0.0) * ddof)

    # apply: divides hoisted to one reciprocal per lane, one FMA per element
    inv = pl.reciprocal(std + EPS)
    if affine:
        scale = gamma_ref[...].astype(jnp.float32) * inv
        shift = beta_ref[...].astype(jnp.float32) - mean * scale
    else:
        scale = inv
        shift = -(mean * inv)
    y_ref[...] = (xf * scale + shift).astype(y_ref.dtype)

    # packed stats (row 0 = mean, row 1 = std).  When folded, every lane group
    # holds the same per-channel value -> the first out_c lanes are the answer.
    stats_ref[:, 0:1, :] = mean[:, :, :out_c]
    stats_ref[:, 1:2, :] = std[:, :, :out_c]


def _revin_stats_kernel(x_ref, stats_ref, *, n_time):
    """Long-T fallback: accumulate sum / sum-of-squares over T tiles into the
    resident stats output block, finalize to (mean, std) on the last step."""
    # TODO(synk): single-pass sum/sumsq can cancel for |mean| >> std; a two-pass
    # version needs a third streaming read of x and is not worth it here.
    t_idx = pl.program_id(2)
    xf = x_ref[...].astype(jnp.float32)                        # (1, tt, tc)
    s = jnp.sum(xf, axis=1, keepdims=True)
    sq = jnp.sum(xf * xf, axis=1, keepdims=True)

    @pl.when(t_idx == 0)
    def _():
        stats_ref[:, 0:1, :] = s
        stats_ref[:, 1:2, :] = sq

    @pl.when(t_idx != 0)
    def _():
        stats_ref[:, 0:1, :] = stats_ref[:, 0:1, :] + s
        stats_ref[:, 1:2, :] = stats_ref[:, 1:2, :] + sq

    @pl.when(t_idx == pl.num_programs(2) - 1)
    def _():
        tot = stats_ref[:, 0:1, :]
        mean = tot * jnp.float32(1.0 / n_time)
        ddof = jnp.float32(1.0 / (n_time - 1)) if n_time > 1 else jnp.float32(jnp.nan)
        var = jnp.maximum(stats_ref[:, 1:2, :] - tot * mean, 0.0) * ddof
        stats_ref[:, 0:1, :] = mean
        stats_ref[:, 1:2, :] = jnp.sqrt(var)


def _revin_apply_kernel(x_ref, gamma_ref, beta_ref, stats_ref, y_ref, *,
                        mode, affine):
    """Streaming per-channel affine map y = x * scale + shift."""
    xf = x_ref[...].astype(jnp.float32)
    mean = stats_ref[:, 0:1, :].astype(jnp.float32)
    std = stats_ref[:, 1:2, :].astype(jnp.float32)
    if mode == "norm":
        inv = pl.reciprocal(std + EPS)
        if affine:
            scale = gamma_ref[...].astype(jnp.float32) * inv
            shift = beta_ref[...].astype(jnp.float32) - mean * scale
        else:
            scale = inv
            shift = -(mean * inv)
    else:  # denorm:  [(x - beta) / (gamma + eps)] * (std + eps) + mean
        if affine:
            scale = (std + EPS) * pl.reciprocal(gamma_ref[...].astype(jnp.float32) + EPS)
            shift = mean - beta_ref[...].astype(jnp.float32) * scale
        else:
            scale = std + EPS
            shift = mean
    y_ref[...] = (xf * scale + shift).astype(y_ref.dtype)


# -------------------------------- wrappers --------------------------------------
def _norm_fused(x, gamma, beta, *, fold_k, affine, c_tile=None):
    B, T, C = x.shape
    if fold_k > 1:
        # Free contiguous view (T, C) -> (T/k, k*C): a 128-multiple lane axis.
        L, R = fold_k * C, T // fold_k
        xw = x.reshape(B, R, L)
        gw = jnp.tile(gamma, (1, 1, fold_k))
        bw = jnp.tile(beta, (1, 1, fold_k))
        tc = L
    else:
        xw, gw, bw = x, gamma, beta
        R = T
        tc = C if c_tile is None else c_tile
        # v7x megacore: prefer >= 2 grid steps when one tile is the whole grid.
        if B == 1 and pl.cdiv(C, tc) == 1 and C % (2 * _LANE) == 0:
            tc = C // 2
    stats_c = C if fold_k > 1 else tc
    grid = (B, pl.cdiv(xw.shape[2], tc))

    x_spec = pl.BlockSpec((1, R, tc), lambda b, c: (b, 0, c))
    p_spec = pl.BlockSpec((1, 1, tc), lambda b, c: (0, 0, c))
    s_spec = pl.BlockSpec((1, 2, stats_c), lambda b, c: (b, 0, c))

    y, stats = pl.pallas_call(
        functools.partial(_revin_norm_fused_kernel, affine=affine,
                          fold_k=fold_k, n_time=T, out_c=stats_c),
        out_shape=(jax.ShapeDtypeStruct(xw.shape, x.dtype),
                   jax.ShapeDtypeStruct((B, 2, C), jnp.float32)),
        grid=grid,
        in_specs=[x_spec, p_spec, p_spec],
        out_specs=(x_spec, s_spec),
        compiler_params=_compiler_params(("parallel", "parallel")),
    )(xw, gw, bw)
    return y.reshape(B, T, C), stats


def _norm_stats_chunked(x, *, c_tile=None, t_tile=None):
    """Stats-only reduction kernel for long T (T tiled, accumulated in VMEM)."""
    B, T, C = x.shape
    isz = x.dtype.itemsize
    sub = _sublane(x.dtype)
    tc = c_tile if c_tile is not None else _pick_c_tile(min(T, 512), C, isz)
    tt = t_tile if t_tile is not None else _pick_t_tile(T, tc, isz, sublane=sub)
    assert T % tt == 0, "stats reduction requires the row tile to divide T"
    grid = (B, pl.cdiv(C, tc), pl.cdiv(T, tt))          # reduction axis innermost

    x_spec = pl.BlockSpec((1, tt, tc), lambda b, c, t: (b, t, c))
    s_spec = pl.BlockSpec((1, 2, tc), lambda b, c, t: (b, 0, c))
    return pl.pallas_call(
        functools.partial(_revin_stats_kernel, n_time=T),
        out_shape=jax.ShapeDtypeStruct((B, 2, C), jnp.float32),
        grid=grid,
        in_specs=[x_spec],
        out_specs=s_spec,
        compiler_params=_compiler_params(("parallel", "parallel", "arbitrary")),
    )(x)


def _apply(x, gamma, beta, stats, *, mode, affine, c_tile=None, t_tile=None):
    """Streaming map kernel (denorm, and the apply stage of the chunked norm)."""
    B, T, C = x.shape
    isz = x.dtype.itemsize
    sub = _sublane(x.dtype)
    k = _fold_factor(T, C)
    if k > 1:
        L, R = k * C, T // k
        xw = x.reshape(B, R, L)
        gw = jnp.tile(gamma, (1, 1, k))
        bw = jnp.tile(beta, (1, 1, k))
        sw = jnp.tile(stats, (1, 1, k))
        tc = L
    else:
        xw, gw, bw, sw = x, gamma, beta, stats
        R = T
        tc = c_tile if c_tile is not None else _pick_c_tile(min(R, 512), C, isz)
    tt = t_tile if t_tile is not None else _pick_t_tile(R, tc, isz, sublane=sub)
    n_ct = pl.cdiv(xw.shape[2], tc)
    # v7x megacore: make sure the grid has >= 2 steps when possible.
    if B * n_ct * pl.cdiv(R, tt) < 2 and tt % (2 * sub) == 0:
        tt //= 2
    # T tiles innermost: gamma/beta/stats block indices are constant along the
    # inner sweep -> they stay VMEM-resident instead of being re-DMA'd.
    grid = (B, n_ct, pl.cdiv(R, tt))

    x_spec = pl.BlockSpec((1, tt, tc), lambda b, c, t: (b, t, c))
    p_spec = pl.BlockSpec((1, 1, tc), lambda b, c, t: (0, 0, c))
    s_spec = pl.BlockSpec((1, 2, tc), lambda b, c, t: (b, 0, c))

    y = pl.pallas_call(
        functools.partial(_revin_apply_kernel, mode=mode, affine=affine),
        out_shape=jax.ShapeDtypeStruct(xw.shape, x.dtype),
        grid=grid,
        in_specs=[x_spec, p_spec, p_spec, s_spec],
        out_specs=x_spec,
        compiler_params=_compiler_params(("parallel", "parallel", "parallel")),
    )(xw, gw, bw, sw)
    return y.reshape(B, T, C)


def revin_norm(x, gamma, beta, *, affine=True,
               max_resident_bytes=_MAX_FUSED_BLOCK_BYTES):
    """x: (B, T, C); gamma/beta: (1, 1, C).
    Returns (y, stats) with stats[:, 0] = mean, stats[:, 1] = std (dim=1, ddof=1)."""
    B, T, C = x.shape
    isz = x.dtype.itemsize
    k = _fold_factor(T, C)
    if k > 1 and (T // k) * (k * C) * isz <= max_resident_bytes:
        return _norm_fused(x, gamma, beta, fold_k=k, affine=affine)
    tc = _pick_c_tile(T, C, isz, max_block_bytes=max_resident_bytes)
    if T * tc * isz <= max_resident_bytes:
        return _norm_fused(x, gamma, beta, fold_k=1, c_tile=tc, affine=affine)
    # Long-T fallback: two-pass (reduction kernel + streaming apply), one extra
    # HBM read of x but bounded VMEM at any sequence length.
    # TODO(synk): the chunked path keeps the un-folded layout even for C < 128.
    stats = _norm_stats_chunked(x)
    y = _apply(x, gamma, beta, stats, mode="norm", affine=affine)
    return y, stats


def revin_denorm(x, gamma, beta, stats, *, affine=True):
    """x: (B, T, C); stats: (B, 2, C) from revin_norm; gamma/beta: (1, 1, C)."""
    return _apply(x, gamma, beta, stats, mode="denorm", affine=affine)


class RevIN:
    """Functional JAX/Pallas port of the PyTorch RevIN module (forward only)."""

    def __init__(self, num_features, affine=True, subtract_last=False):
        self.affine = affine
        self.subtract_last = subtract_last  # parity only; reference forward() never uses it
        self.eps = EPS
        self.gamma = jnp.ones((1, 1, num_features), jnp.float32)
        self.beta = jnp.zeros((1, 1, num_features), jnp.float32)
        self.stats = None
        self.mean = None
        self.std = None

    def __call__(self, x, mode):
        if mode == "norm":
            y, self.stats = revin_norm(x, self.gamma, self.beta, affine=self.affine)
            self.mean = self.stats[:, 0:1, :]
            self.std = self.stats[:, 1:2, :]
            return y
        elif mode == "denorm":
            return revin_denorm(x, self.gamma, self.beta, self.stats, affine=self.affine)
        else:
            raise ValueError("Mode must be 'norm' or 'denorm'")


# ----------------------------------- main ----------------------------------------
def _ref_norm(x, gamma, beta, affine):
    m = jnp.mean(x, axis=1, keepdims=True)
    s = jnp.std(x, axis=1, keepdims=True, ddof=1)
    y = (x - m) / (s + EPS)
    if affine:
        y = y * gamma + beta
    return y, m, s


if __name__ == "__main__":
    ks = jax.random.split(jax.random.PRNGKey(0), 8)

    # ---- 1. module-sized shapes (B, T, C) = (2, 8, 4), affine=True ----------
    B, T, C = 2, 8, 4
    x = jax.random.normal(ks[0], (B, T, C), jnp.float32) * 3.0 + 1.5
    layer = RevIN(num_features=C, affine=True)
    y = jax.block_until_ready(layer(x, "norm"))
    ref_y, ref_m, ref_s = _ref_norm(x, layer.gamma, layer.beta, True)
    assert jnp.allclose(y, ref_y, atol=1e-4, rtol=1e-4), "norm mismatch"
    assert jnp.allclose(layer.mean, ref_m, atol=1e-5, rtol=1e-5), "mean mismatch"
    assert jnp.allclose(layer.std, ref_s, atol=1e-4, rtol=1e-4), "std mismatch"
    x_rec = jax.block_until_ready(layer(y, "denorm"))
    assert jnp.allclose(x_rec, x, atol=1e-3, rtol=1e-3), "denorm round-trip mismatch"

    # ---- 1b. affine=False (denorm must NOT divide by 1 + eps) ----------------
    layer_na = RevIN(num_features=C, affine=False)
    y_na = layer_na(x, "norm")
    ref_na = (x - ref_m) / (ref_s + EPS)
    assert jnp.allclose(y_na, ref_na, atol=1e-4, rtol=1e-4), "affine=False norm mismatch"
    x_na = jax.block_until_ready(layer_na(y_na, "denorm"))
    assert jnp.allclose(x_na, x, atol=1e-3, rtol=1e-3), "affine=False round-trip mismatch"

    # ---- 2. lane-dense folded path: C=16 < 128, T=64 -> free (T/8, 128) view --
    B2, T2, C2 = 2, 64, 16
    x2 = jax.random.normal(ks[1], (B2, T2, C2), jnp.float32) * 2.0 - 0.5
    g2 = jnp.full((1, 1, C2), 0.5, jnp.float32)
    b2 = jnp.full((1, 1, C2), -0.25, jnp.float32)
    y2, st2 = revin_norm(x2, g2, b2)
    ref2, m2, s2 = _ref_norm(x2, g2, b2, True)
    assert jnp.allclose(y2, ref2, atol=1e-4, rtol=1e-4), "folded norm mismatch"
    assert jnp.allclose(st2[:, 0:1, :], m2, atol=1e-5, rtol=1e-5), "folded mean mismatch"
    assert jnp.allclose(st2[:, 1:2, :], s2, atol=1e-4, rtol=1e-4), "folded std mismatch"
    x2r = jax.block_until_ready(revin_denorm(y2, g2, b2, st2))
    assert jnp.allclose(x2r, x2, atol=1e-3, rtol=1e-3), "folded denorm mismatch"

    # ---- 3. multi-C-tile with masked tail: C=192 (> 128, not a multiple) -----
    B3, T3, C3 = 2, 16, 192
    x3 = jax.random.normal(ks[2], (B3, T3, C3), jnp.float32)
    g3 = jax.random.normal(ks[3], (1, 1, C3), jnp.float32) * 0.1 + 1.0
    b3 = jax.random.normal(ks[4], (1, 1, C3), jnp.float32) * 0.1
    y3, st3 = revin_norm(x3, g3, b3)
    ref3, m3, s3 = _ref_norm(x3, g3, b3, True)
    assert jnp.allclose(y3, ref3, atol=1e-4, rtol=1e-4), "tiled norm mismatch"
    assert jnp.allclose(st3[:, 1:2, :], s3, atol=1e-4, rtol=1e-4), "tiled std mismatch"
    x3r = jax.block_until_ready(revin_denorm(y3, g3, b3, st3))
    assert jnp.allclose(x3r, x3, atol=1e-3, rtol=1e-3), "tiled denorm mismatch"

    # ---- 4. long-T chunked fallback (stats reduction + streaming apply) ------
    B4, T4, C4 = 2, 256, 128
    x4 = jax.random.normal(ks[5], (B4, T4, C4), jnp.float32) + 2.0
    g4 = jnp.ones((1, 1, C4), jnp.float32)
    b4 = jnp.zeros((1, 1, C4), jnp.float32)
    y4, st4 = revin_norm(x4, g4, b4, max_resident_bytes=32 * 1024)  # force chunked
    st4b = _norm_stats_chunked(x4, t_tile=64)                       # 4 reduction steps
    y4b = _apply(x4, g4, b4, st4b, mode="norm", affine=True, t_tile=64)
    ref4, m4, s4 = _ref_norm(x4, g4, b4, True)
    for yy, ss in ((y4, st4), (y4b, st4b)):
        yy = jax.block_until_ready(yy)
        assert jnp.allclose(yy, ref4, atol=1e-3, rtol=1e-3), "chunked norm mismatch"
        assert jnp.allclose(ss[:, 0:1, :], m4, atol=1e-3, rtol=1e-3), "chunked mean mismatch"
        assert jnp.allclose(ss[:, 1:2, :], s4, atol=1e-3, rtol=1e-3), "chunked std mismatch"

    print("KERNEL_OK")
</pallas_src>

<mosaic_0001>
module attributes {stable_mosaic.version = 11 : i64} {
  func.func @_revin_norm_fused_kernel(%arg0: i32, %arg1: i32, %arg2: memref<1x8x4xf32, #tpu.memory_space<vmem>>, %arg3: memref<1x1x4xf32, #tpu.memory_space<vmem>>, %arg4: memref<1x1x4xf32, #tpu.memory_space<vmem>>, %arg5: memref<1x8x4xf32, #tpu.memory_space<vmem>>, %arg6: memref<1x2x4xf32, #tpu.memory_space<vmem>>) attributes {dimension_semantics = [#tpu.dimension_semantics<parallel>, #tpu.dimension_semantics<parallel>], iteration_bounds = array<i64: 2, 1>, scalar_prefetch = 0 : i64, scratch_operands = 0 : i64, tpu.core_type = #tpu.core_type<tc>, window_params = [{transform_indices = @transform_0, window_bounds = array<i64: 1, 8, 4>}, {transform_indices = @transform_1, window_bounds = array<i64: 1, 1, 4>}, {transform_indices = @transform_2, window_bounds = array<i64: 1, 1, 4>}, {transform_indices = @transform_3, window_bounds = array<i64: 1, 8, 4>}, {transform_indices = @transform_4, window_bounds = array<i64: 1, 2, 4>}]} {
    %c0 = arith.constant 0 : index
    %c0_0 = arith.constant 0 : index
    %c0_1 = arith.constant 0 : index
    %0 = vector.load %arg2[%c0, %c0_0, %c0_1] : memref<1x8x4xf32, #tpu.memory_space<vmem>>, vector<1x8x4xf32>
    %cst = arith.constant dense<0.000000e+00> : vector<1x4xf32>
    %1 = vector.multi_reduction <add>, %0, %cst [1] : vector<1x8x4xf32> to vector<1x4xf32>
    %2 = vector.shape_cast %1 : vector<1x4xf32> to vector<1x1x4xf32>
    %cst_2 = arith.constant 1.250000e-01 : f32
    %3 = vector.broadcast %cst_2 : f32 to vector<1x1x4xf32>
    %4 = arith.mulf %2, %3 : vector<1x1x4xf32>
    %5 = vector.broadcast %4 : vector<1x1x4xf32> to vector<1x8x4xf32>
    %6 = arith.subf %0, %5 : vector<1x8x4xf32>
    %7 = arith.mulf %6, %6 : vector<1x8x4xf32>
    %cst_3 = arith.constant dense<0.000000e+00> : vector<1x4xf32>
    %8 = vector.multi_reduction <add>, %7, %cst_3 [1] : vector<1x8x4xf32> to vector<1x4xf32>
    %9 = vector.shape_cast %8 : vector<1x4xf32> to vector<1x1x4xf32>
    %cst_4 = arith.constant 0.000000e+00 : f32
    %10 = vector.broadcast %cst_4 : f32 to vector<1x1x4xf32>
    %11 = arith.maximumf %9, %10 : vector<1x1x4xf32>
    %cst_5 = arith.constant 0.142857149 : f32
    %12 = vector.broadcast %cst_5 : f32 to vector<1x1x4xf32>
    %13 = arith.mulf %11, %12 : vector<1x1x4xf32>
    %14 = math.sqrt %13 : vector<1x1x4xf32>
    %cst_6 = arith.constant 9.99999974E-6 : f32
    %15 = vector.broadcast %cst_6 : f32 to vector<1x1x4xf32>
    %16 = arith.addf %14, %15 : vector<1x1x4xf32>
    %17 = tpu.reciprocal %16 : vector<1x1x4xf32> -> vector<1x1x4xf32>
    %c0_7 = arith.constant 0 : index
    %c0_8 = arith.constant 0 : index
    %c0_9 = arith.constant 0 : index
    %18 = vector.load %arg3[%c0_7, %c0_8, %c0_9] : memref<1x1x4xf32, #tpu.memory_space<vmem>>, vector<1x1x4xf32>
    %19 = arith.mulf %18, %17 : vector<1x1x4xf32>
    %c0_10 = arith.constant 0 : index
    %c0_11 = arith.constant 0 : index
    %c0_12 = arith.constant 0 : index
    %20 = vector.load %arg4[%c0_10, %c0_11, %c0_12] : memref<1x1x4xf32, #tpu.memory_space<vmem>>, vector<1x1x4xf32>
    %21 = arith.mulf %4, %19 : vector<1x1x4xf32>
    %22 = arith.subf %20, %21 : vector<1x1x4xf32>
    %23 = vector.broadcast %19 : vector<1x1x4xf32> to vector<1x8x4xf32>
    %24 = arith.mulf %0, %23 : vector<1x8x4xf32>
    %25 = vector.broadcast %22 : vector<1x1x4xf32> to vector<1x8x4xf32>
    %26 = arith.addf %24, %25 : vector<1x8x4xf32>
    %c0_13 = arith.constant 0 : index
    %c0_14 = arith.constant 0 : index
    %c0_15 = arith.constant 0 : index
    %27 = vector.load %arg5[%c0_13, %c0_14, %c0_15] : memref<1x8x4xf32, #tpu.memory_space<vmem>>, vector<1x8x4xf32>
    tpu.vector_store %arg5[%c0_13, %c0_14, %c0_15], %26 {strides = array<i32>} : memref<1x8x4xf32, #tpu.memory_space<vmem>>, vector<1x8x4xf32>,
    %c0_16 = arith.constant 0 : index
    %c0_17 = arith.constant 0 : index
    %c0_18 = arith.constant 0 : index
    %28 = vector.load %arg6[%c0_16, %c0_17, %c0_18] : memref<1x2x4xf32, #tpu.memory_space<vmem>>, vector<1x1x4xf32>
    tpu.vector_store %arg6[%c0_16, %c0_17, %c0_18], %4 {strides = array<i32>} : memref<1x2x4xf32, #tpu.memory_space<vmem>>, vector<1x1x4xf32>,
    %c0_19 = arith.constant 0 : index
    %c1 = arith.constant 1 : index
    %c0_20 = arith.constant 0 : index
    %29 = vector.load %arg6[%c0_19, %c1, %c0_20] : memref<1x2x4xf32, #tpu.memory_space<vmem>>, vector<1x1x4xf32>
    tpu.vector_store %arg6[%c0_19, %c1, %c0_20], %14 {strides = array<i32>} : memref<1x2x4xf32, #tpu.memory_space<vmem>>, vector<1x1x4xf32>,
    return
  }
  func.func @transform_0(%arg0: i32, %arg1: i32) -> (i32, i32, i32) {
    %c0_i32 = arith.constant 0 : i32
    %c0_i32_0 = arith.constant 0 : i32
    return %arg0, %c0_i32, %arg1 : i32, i32, i32
  }
  func.func @transform_1(%arg0: i32, %arg1: i32) -> (i32, i32, i32) {
    %c0_i32 = arith.constant 0 : i32
    %c0_i32_0 = arith.constant 0 : i32
    %c0_i32_1 = arith.constant 0 : i32
    return %c0_i32, %c0_i32_0, %arg1 : i32, i32, i32
  }
  func.func @transform_2(%arg0: i32, %arg1: i32) -> (i32, i32, i32) {
    %c0_i32 = arith.constant 0 : i32
    %c0_i32_0 = arith.constant 0 : i32
    %c0_i32_1 = arith.constant 0 : i32
    return %c0_i32, %c0_i32_0, %arg1 : i32, i32, i32
  }
  func.func @transform_3(%arg0: i32, %arg1: i32) -> (i32, i32, i32) {
    %c0_i32 = arith.constant 0 : i32
    %c0_i32_0 = arith.constant 0 : i32
    return %arg0, %c0_i32, %arg1 : i32, i32, i32
  }
  func.func @transform_4(%arg0: i32, %arg1: i32) -> (i32, i32, i32) {
    %c0_i32 = arith.constant 0 : i32
    %c0_i32_0 = arith.constant 0 : i32
    return %arg0, %c0_i32, %arg1 : i32, i32, i32
  }
}

</mosaic_0001>

<llo_original>
// kernel: tpu_custom_call.1
$region0: #{tpu_custom_call.1}
  #allocation0 [shape = 'u32[]', space=smem, size = 0x4, offset = 0x4, fixed_abs, tag = 'smem constant byte address 0x4 - core index']
  #allocation1 [shape = 'u32[144,128]{1,0:T(1,128)}', space=vmem, size = 0x12000, scoped, tag = 'internal scratch']
  %s0 = inlined_call_operand.vmem [shape: f32[2,8,4], index: 0, kind: input, shape index: {}]
  %s1 = inlined_call_operand.vmem [shape: f32[1,1,4], index: 1, kind: input, shape index: {}]
  %s2 = inlined_call_operand.vmem [shape: f32[1,1,4], index: 2, kind: input, shape index: {}]
  %s3 = inlined_call_operand.vmem [shape: f32[2,8,4], index: 3, kind: output, shape index: {0}]
  %s4 = inlined_call_operand.hbm [shape: f32[2,2,4], index: 4, kind: output, shape index: {1}]
  %5 = xla_tuple %s3, %s4
  %s6 = sld [smem:[#allocation0]]
  $region53: #{tpu_custom_call.1} parent=0
    _
  %s8 = ssub.s32 1, %s6
  %s9 = scalar_select 0, %s8, %s6
  $region1: #{tpu_custom_call.1} parent=0
    #allocation2 [shape = 'u8[2048]{0}', space=vmem, size = 0x800, scoped, tag = 'output window, operand 1']
    #allocation3 [shape = 's32[2]{0}', space=sflag, size = 0x8, scoped, tag = 'scoped memory for tpu_custom_call.1']
    %10 = vsyncpa [#allocation3], 0
    %s11 = scalar_lea.sflag [#allocation3], 1
    %12 = vsyncpa %s11, 0
    loop: start=0, step=1, limit=4
    $region2: #{tpu_custom_call.1} parent=1 // loop_pre_header
      _
    $region3: #{tpu_custom_call.1} parent=1 // loop_header
      %s14 = sphi 0, %s18
      %p15 = scmp.ge.s32.totalorder %s14, 4
      %s21 = sphi 0, %s33
      %s22 = sphi 0, %s29
      %s23 = sphi 0, %s21
      %s24 = sphi 0, %s22
      %s25 = sphi 0, %s23
      %s26 = sphi 0, %s24
      %s38 = sphi 0, %s40
      %s41 = sphi 0, %s38
      %s42 = sphi 0, %s41
      %s58 = sphi 0, %s42
      %s64 = sphi 0, %s66
      %s67 = sphi 0, %s64
      %s68 = sphi 0, %s67
      %s84 = sphi 0, %s68
      %s90 = sphi 0, %s92
      %s93 = sphi 0, %s90
      %s94 = sphi 0, %s93
      %s110 = sphi 0, %s94
      %s118 = sphi 0, %s120
      %s121 = sphi 0, %s118
      %s122 = sphi 0, %s121
      %s138 = sphi 0, %s122
      %s146 = sphi 0, %s148
      %s149 = sphi 0, %s146
      %s150 = sphi 0, %s149
      %s166 = sphi 0, %s150
    $region4: #{tpu_custom_call.1} parent=1 // loop_header_branch
      %17 = sbr.rel (%p15) target = $region8
    $region5: #{tpu_custom_call.1} parent=1 // loop_body
      %s19 = ssub.s32 %s14, 1
      %s20 = ssub.s32 %s14, 2
      %s27 = sadd.s32 1, %s22
      %p28 = scmp.ge.s32.totalorder %s27, 1
      %s29 = scalar_select %p28, 0, %s27
      %s30 = sadd.s32 1, %s21
      %s31 = scalar_select %p28, %s30, %s21
      %p32 = scmp.ge.s32.totalorder %s31, 2
      %s33 = scalar_select %p32, 0, %s31
      %s34 = ssub.s32 %s21, %s33
      %s35 = ssub.s32 %s22, %s29
      %s36 = sor.u32 %s34, %s35
      %p37 = scmp.eq.s32.totalorder %s36, 0
      %s39 = sadd.s32 %s38, 1
      %s40 = scalar_select %p37, %s38, %s39
      %p43 = pneg %p37
      %p44 = scmp.eq.s32.totalorder %s14, 1
      %p45 = por %p43, %p44
      %p46 = scmp.ne.s32.totalorder %s38, %s41
      %p47 = scmp.eq.s32.totalorder %s14, 0
      %p48 = por %p46, %p47
      %p49 = scmp.ne.s32.totalorder %s38, %s41
      %p50 = scmp.eq.s32.totalorder %s19, 1
      %p51 = por %p49, %p50
      %p52 = scmp.ne.s32.totalorder %s41, %s42
      %p53 = scmp.eq.s32.totalorder %s19, 0
      %p54 = por %p52, %p53
      %p55 = scmp.ne.s32.totalorder %s41, %s42
      %p56 = scmp.eq.s32.totalorder %s20, 1
      %p57 = por %p55, %p56
      %p59 = scmp.ne.s32.totalorder %s42, %s58
      %p60 = scmp.eq.s32.totalorder %s20, 0
      %p61 = por %p59, %p60
      %s62 = ssub.s32 %s22, %s29
      %p63 = scmp.eq.s32.totalorder %s62, 0
      %s65 = sadd.s32 %s64, 1
      %s66 = scalar_select %p63, %s64, %s65
      %p69 = pneg %p63
      %p70 = scmp.eq.s32.totalorder %s14, 1
      %p71 = por %p69, %p70
      %p72 = scmp.ne.s32.totalorder %s64, %s67
      %p73 = scmp.eq.s32.totalorder %s14, 0
      %p74 = por %p72, %p73
      %p75 = scmp.ne.s32.totalorder %s64, %s67
      %p76 = scmp.eq.s32.totalorder %s19, 1
      %p77 = por %p75, %p76
      %p78 = scmp.ne.s32.totalorder %s67, %s68
      %p79 = scmp.eq.s32.totalorder %s19, 0
      %p80 = por %p78, %p79
      %p81 = scmp.ne.s32.totalorder %s67, %s68
      %p82 = scmp.eq.s32.totalorder %s20, 1
      %p83 = por %p81, %p82
      %p85 = scmp.ne.s32.totalorder %s68, %s84
      %p86 = scmp.eq.s32.totalorder %s20, 0
      %p87 = por %p85, %p86
      %s88 = ssub.s32 %s22, %s29
      %p89 = scmp.eq.s32.totalorder %s88, 0
      %s91 = sadd.s32 %s90, 1
      %s92 = scalar_select %p89, %s90, %s91
      %p95 = pneg %p89
      %p96 = scmp.eq.s32.totalorder %s14, 1
      %p97 = por %p95, %p96
      %p98 = scmp.ne.s32.totalorder %s90, %s93
      %p99 = scmp.eq.s32.totalorder %s14, 0
      %p100 = por %p98, %p99
      %p101 = scmp.ne.s32.totalorder %s90, %s93
      %p102 = scmp.eq.s32.totalorder %s19, 1
      %p103 = por %p101, %p102
      %p104 = scmp.ne.s32.totalorder %s93, %s94
      %p105 = scmp.eq.s32.totalorder %s19, 0
      %p106 = por %p104, %p105
      %p107 = scmp.ne.s32.totalorder %s93, %s94
      %p108 = scmp.eq.s32.totalorder %s20, 1
      %p109 = por %p107, %p108
      %p111 = scmp.ne.s32.totalorder %s94, %s110
      %p112 = scmp.eq.s32.totalorder %s20, 0
      %p113 = por %p111, %p112
      %s114 = ssub.s32 %s21, %s33
      %s115 = ssub.s32 %s22, %s29
      %s116 = sor.u32 %s114, %s115
      %p117 = scmp.eq.s32.totalorder %s116, 0
      %s119 = sadd.s32 %s118, 1
      %s120 = scalar_select %p117, %s118, %s119
      %p123 = pneg %p117
      %p124 = scmp.eq.s32.totalorder %s14, 1
      %p125 = por %p123, %p124
      %p126 = scmp.ne.s32.totalorder %s118, %s121
      %p127 = scmp.eq.s32.totalorder %s14, 0
      %p128 = por %p126, %p127
      %p129 = scmp.ne.s32.totalorder %s118, %s121
      %p130 = scmp.eq.s32.totalorder %s19, 1
      %p131 = por %p129, %p130
      %p132 = scmp.ne.s32.totalorder %s121, %s122
      %p133 = scmp.eq.s32.totalorder %s19, 0
      %p134 = por %p132, %p133
      %p135 = scmp.ne.s32.totalorder %s121, %s122
      %p136 = scmp.eq.s32.totalorder %s20, 1
      %p137 = por %p135, %p136
      %p139 = scmp.ne.s32.totalorder %s122, %s138
      %p140 = scmp.eq.s32.totalorder %s20, 0
      %p141 = por %p139, %p140
      %s142 = ssub.s32 %s21, %s33
      %s143 = ssub.s32 %s22, %s29
      %s144 = sor.u32 %s142, %s143
      %p145 = scmp.eq.s32.totalorder %s144, 0
      %s147 = sadd.s32 %s146, 1
      %s148 = scalar_select %p145, %s146, %s147
      %p151 = pneg %p145
      %p152 = scmp.eq.s32.totalorder %s14, 1
      %p153 = por %p151, %p152
      %p154 = scmp.ne.s32.totalorder %s146, %s149
      %p155 = scmp.eq.s32.totalorder %s14, 0
      %p156 = por %p154, %p155
      %p157 = scmp.ne.s32.totalorder %s146, %s149
      %p158 = scmp.eq.s32.totalorder %s19, 1
      %p159 = por %p157, %p158
      %p160 = scmp.ne.s32.totalorder %s149, %s150
      %p161 = scmp.eq.s32.totalorder %s19, 0
      %p162 = por %p160, %p161
      %p163 = scmp.ne.s32.totalorder %s149, %s150
      %p164 = scmp.eq.s32.totalorder %s20, 1
      %p165 = por %p163, %p164
      %p167 = scmp.ne.s32.totalorder %s150, %s166
      %p168 = scmp.eq.s32.totalorder %s20, 0
      %p169 = por %p167, %p168
      %p170 = scmp.le.s32.totalorder 1, %s14
      %p171 = scmp.lt.s32.totalorder %s14, 3
      %p172 = pnand %p170, %p171
      %p173 = pneg %p172
      // Predicated region
      $region9: #{tpu_custom_call.1} parent=5 // pred_check
        _
      $region10: #{tpu_custom_call.1} parent=5 // pred_check_branch
        %175 = sbr.rel (%p172) target = $region12
      $region11: #{tpu_custom_call.1} parent=5 // pred_region
        %s176 = ssub.s32 %s14, 1
        // Predicated region
        $region13: #{tpu_custom_call.1} parent=11 // pred_check
          %p177 = pneg %p80
        $region14: #{tpu_custom_call.1} parent=11 // pred_check_branch
          %179 = sbr.rel (%p177) target = $region16
        $region15: #{tpu_custom_call.1} parent=11 // pred_region
          %p180 = scmp.lt.s32.totalorder %s24, 0
          %s181 = scalar_select %p180, %s24, 0
          %s182 = scalar_lea.vmem %s1, %s181
        $region16: #{tpu_custom_call.1} parent=11 // pred_fallthru
          _
        // Predicated region
        $region17: #{tpu_custom_call.1} parent=11 // pred_check
          %p183 = pneg %p106
        $region18: #{tpu_custom_call.1} parent=11 // pred_check_branch
          %185 = sbr.rel (%p183) target = $region20
        $region19: #{tpu_custom_call.1} parent=11 // pred_region
          %p186 = scmp.lt.s32.totalorder %s24, 0
          %s187 = scalar_select %p186, %s24, 0
          %s188 = scalar_lea.vmem %s2, %s187
        $region20: #{tpu_custom_call.1} parent=11 // pred_fallthru
          _
      $region12: #{tpu_custom_call.1} parent=5 // pred_fallthru
        _
      %p189 = scmp.lt.s32.totalorder %s14, 2
      // Predicated region
      $region21: #{tpu_custom_call.1} parent=5 // pred_check
        %p190 = pneg %p189
      $region22: #{tpu_custom_call.1} parent=5 // pred_check_branch
        %192 = sbr.rel (%p190) target = $region24
      $region23: #{tpu_custom_call.1} parent=5 // pred_region
        // Predicated region
        $region25: #{tpu_custom_call.1} parent=23 // pred_check
          %p193 = pneg %p48
        $region26: #{tpu_custom_call.1} parent=23 // pred_check_branch
          %195 = sbr.rel (%p193) target = $region28
        $region27: #{tpu_custom_call.1} parent=23 // pred_region
          %p196 = scmp.lt.s32.totalorder %s21, 1
          %s197 = scalar_select %p196, %s21, 1
          %p198 = scmp.lt.s32.totalorder %s22, 0
          %s199 = scalar_select %p198, %s22, 0
          %s200 = sadd.s32 %s199, %s197
          %s201 = smul.addr %s200, 8
          %s202 = scalar_lea.vmem %s0, %s201
        $region28: #{tpu_custom_call.1} parent=23 // pred_fallthru
          _
      $region24: #{tpu_custom_call.1} parent=5 // pred_fallthru
        _
      %p203 = scmp.le.s32.totalorder 1, %s14
      %p204 = scmp.lt.s32.totalorder %s14, 3
      %p205 = pnand %p203, %p204
      %p206 = pneg %p205
      // Predicated region
      $region29: #{tpu_custom_call.1} parent=5 // pred_check
        _
      $region30: #{tpu_custom_call.1} parent=5 // pred_check_branch
        %208 = sbr.rel (%p205) target = $region32
      $region31: #{tpu_custom_call.1} parent=5 // pred_region
        %s209 = ssub.s32 %s14, 1
        %p210 = scmp.lt.s32.totalorder %s23, 1
        %s211 = scalar_select %p210, %s23, 1
        %p212 = scmp.lt.s32.totalorder %s24, 0
        %s213 = scalar_select %p212, %s24, 0
        %s214 = sadd.s32 %s213, %s211
        %s215 = smul.addr %s214, 8
        %s216 = scalar_lea.vmem %s0, %s215
        %p217 = pneg %p54
        %p218 = pneg %p51
        %p219 = scmp.lt.s32.totalorder %s24, 0
        %s220 = scalar_select %p219, %s24, 0
        %s221 = scalar_lea.vmem %s1, %s220
        %p222 = pneg %p80
        %p223 = pneg %p77
        %p224 = scmp.lt.s32.totalorder %s24, 0
        %s225 = scalar_select %p224, %s24, 0
        %s226 = scalar_lea.vmem %s2, %s225
        %p227 = pneg %p106
        %p228 = pneg %p103
        %p229 = pneg %p134
        %p230 = pneg %p131
        %p231 = scmp.lt.s32.totalorder %s23, 1
        %s232 = scalar_select %p231, %s23, 1
        %p233 = scmp.lt.s32.totalorder %s24, 0
        %s234 = scalar_select %p233, %s24, 0
        %s235 = sadd.s32 %s234, %s232
        %s236 = smul.addr %s235, 8
        %s237 = scalar_lea.vmem %s3, %s236
        %p238 = pneg %p162
        %p239 = pneg %p159
        %s240 = sand.u32 %s149, 1
        %s241 = scalar_lea.sflag [#allocation3], %s240
        %s242 = sand.u32 %s149, 1
        %s243 = smul.addr %s242, 2
        %s244 = scalar_lea.vmem [#allocation2], %s243
        %p245 = scmp.lt.s32.totalorder %s23, 1
        %s246 = scalar_select %p245, %s23, 1
        %p247 = scmp.lt.s32.totalorder %s24, 0
        %s248 = scalar_select %p247, %s24, 0
        %s249 = sadd.s32 %s248, %s246
        %s250 = smul.addr %s249, 8
        %s251 = scalar_lea.vmem %s0, %s250
        %p252 = scmp.lt.s32.totalorder %s24, 0
        %s253 = scalar_select %p252, %s24, 0
        %s254 = scalar_lea.vmem %s1, %s253
        %p255 = scmp.lt.s32.totalorder %s24, 0
        %s256 = scalar_select %p255, %s24, 0
        %s257 = scalar_lea.vmem %s2, %s256
        %p258 = scmp.lt.s32.totalorder %s23, 1
        %s259 = scalar_select %p258, %s23, 1
        %p260 = scmp.lt.s32.totalorder %s24, 0
        %s261 = scalar_select %p260, %s24, 0
        %s262 = sadd.s32 %s261, %s259
        %s263 = smul.addr %s262, 8
        %s264 = scalar_lea.vmem %s3, %s263
        %v265 = vld [vmem:[%s251] sm:$0xff]
        %vm266 = vcmask 31744
        %v267 = vsel %vm266, %v265, 0.0
        %v268 = vrot.slane %v267, 4
        %v269 = vadd.f32 %v267, %v268
        %v270 = vrot.slane %v269, 2
        %v271 = vadd.f32 %v269, %v270
        %v272 = vrot.slane %v271, 1
        %v273 = vadd.f32 %v271, %v272
        %v274 = vmul.f32 %v273, 0.125
        %v275 = vsub.f32 %v265, %v274
        %v276 = vmul.f32 %v275, %v275
        %v277 = vsel %vm266, %v276, 0.0
        %v278 = vrot.slane %v277, 4
        %v279 = vadd.f32 %v277, %v278
        %v280 = vrot.slane %v279, 2
        %v281 = vadd.f32 %v279, %v280
        %v282 = vrot.slane %v281, 1
        %v283 = vadd.f32 %v281, %v282
        %v284 = vmax.f32 %v283, 0.0
        %v285 = vmul.f32 %v284, 0.14285715
        %v286 = vrsqrt.pop %v285
        %v287 = vmul.f32 %v285, %v286
        %vm288 = vcmp.eq.f32.partialorder %v285, inf
        %v289 = vsel %vm288, %v285, %v287
        %vm290 = vcmp.eq.f32.partialorder %v285, 0.0
        %v291 = vand.u32 %v285, 2147483648
        %v292 = vsel %vm290, %v291, %v289
        %v293 = vadd.f32 %v292, 1e-05
        %v294 = vrcp.pop %v293
        %v295 = vld [vmem:[%s254] sm:$0x1]
        %v296 = vmul.f32 %v295, %v294
        %v297 = vld [vmem:[%s257] sm:$0x1]
        %v298 = vmul.f32 %v274, %v296
        %v299 = vsub.f32 %v297, %v298
        %v301 = vlaneseq
        %v302 = vshrl.u32 %v301, 7
        %v303 = vsub.s32 0, %v302
        %v304 = vrot.slane %v296, %v303
        %v306 = vmul.f32 %v265, %v304
        %v308 = vlaneseq
        %v309 = vshrl.u32 %v308, 7
        %v310 = vsub.s32 0, %v309
        %v311 = vrot.slane %v299, %v310
        %v313 = vadd.f32 %v306, %v311
        %314 = vst.msk [vmem:[%s264] sm:$0xff] %vm266, %v313
        %vm315 = vcmask 24576
        %316 = vst.msk [vmem:[%s244] sm:$0x1] %vm315, %v274
        %317 = vst.msk [vmem:[%s244 + $0x1] sm:$0x1] %vm315, %v292
        %p318 = scmp.lt.s32.totalorder %s23, 1
        %s319 = scalar_select %p318, %s23, 1
        %p320 = scmp.lt.s32.totalorder %s24, 0
        %s321 = scalar_select %p320, %s24, 0
        %s322 = sadd.s32 %s321, %s319
        %s323 = smul.addr %s322, 8
        %s324 = scalar_lea.vmem %s3, %s323
        %s325 = sand.u32 %s149, 1
        %s326 = scalar_lea.sflag [#allocation3], %s325
        %s327 = sand.u32 %s149, 1
        %s328 = smul.addr %s327, 2
        %s329 = scalar_lea.vmem [#allocation2], %s328
        // Predicated region
        $region33: #{tpu_custom_call.1} parent=31 // pred_check
          %p330 = pneg %p131
        $region34: #{tpu_custom_call.1} parent=31 // pred_check_branch
          %332 = sbr.rel (%p330) target = $region36
        $region35: #{tpu_custom_call.1} parent=31 // pred_region
          _
        $region36: #{tpu_custom_call.1} parent=31 // pred_fallthru
          _
        // Predicated region
        $region37: #{tpu_custom_call.1} parent=31 // pred_check
          %p333 = pneg %p159
        $region38: #{tpu_custom_call.1} parent=31 // pred_check_branch
          %335 = sbr.rel (%p333) target = $region40
        $region39: #{tpu_custom_call.1} parent=31 // pred_region
          %s337 = ssub.s32 32, 32
          %338 = vsyncadd %s326, %s337
          %s339 = sadd.s32 %s24, %s23
          %s340 = smul.addr %s339, 32
          %s341 = scalar_lea.hbm %s4, %s340
          %s343 = sshll.u32 %s329, 4
          %s344 = int_to_ptr.vmem [resolvable:$true] %s343
          %346 = dma.vmem_to_hbm [thread:$0]  %s344, 32, %s341, %s326
        $region40: #{tpu_custom_call.1} parent=31 // pred_fallthru
          _
      $region32: #{tpu_custom_call.1} parent=5 // pred_fallthru
        _
      %p347 = scmp.le.s32.totalorder 2, %s14
      // Predicated region
      $region41: #{tpu_custom_call.1} parent=5 // pred_check
        %p348 = pneg %p347
      $region42: #{tpu_custom_call.1} parent=5 // pred_check_branch
        %350 = sbr.rel (%p348) target = $region44
      $region43: #{tpu_custom_call.1} parent=5 // pred_region
        %s351 = ssub.s32 %s14, 2
        // Predicated region
        $region45: #{tpu_custom_call.1} parent=43 // pred_check
          %p352 = pneg %p137
        $region46: #{tpu_custom_call.1} parent=43 // pred_check_branch
          %354 = sbr.rel (%p352) target = $region48
        $region47: #{tpu_custom_call.1} parent=43 // pred_region
          %p355 = scmp.lt.s32.totalorder %s25, 1
          %s356 = scalar_select %p355, %s25, 1
          %p357 = scmp.lt.s32.totalorder %s26, 0
          %s358 = scalar_select %p357, %s26, 0
          %s359 = sadd.s32 %s358, %s356
          %s360 = smul.addr %s359, 8
          %s361 = scalar_lea.vmem %s3, %s360
        $region48: #{tpu_custom_call.1} parent=43 // pred_fallthru
          _
        // Predicated region
        $region49: #{tpu_custom_call.1} parent=43 // pred_check
          %p362 = pneg %p165
        $region50: #{tpu_custom_call.1} parent=43 // pred_check_branch
          %364 = sbr.rel (%p362) target = $region52
        $region51: #{tpu_custom_call.1} parent=43 // pred_region
          %s365 = sand.u32 %s150, 1
          %s366 = scalar_lea.sflag [#allocation3], %s365
          %s367 = sand.u32 %s150, 1
          %s368 = smul.addr %s367, 2
          %s369 = scalar_lea.vmem [#allocation2], %s368
          %370 = dma.done %s366, 32
        $region52: #{tpu_custom_call.1} parent=43 // pred_fallthru
          _
      $region44: #{tpu_custom_call.1} parent=5 // pred_fallthru
        _
    $region6: #{tpu_custom_call.1} parent=1 // loop_footer
      %s18 = sadd.s32 1, %s14
    $region7: #{tpu_custom_call.1} parent=1 // loop_footer_branch
      %13 = sbr.rel target = $region3
    $region8: #{tpu_custom_call.1} parent=1 // loop_exit
      _
    %371 = vsyncpa [#allocation3], 1
    %s372 = scalar_lea.sflag [#allocation3], 1
    %373 = vsyncpa %s372, 1

</llo_original>
